<compile_context>
chip_gen: v6e
topology: v6e:2x2x1
jax: 0.10.0
libtpu: 0.0.40
codegen_flags: <defaults>
</compile_context>

<pallas_src>
import functools
import math

import jax
import jax.numpy as jnp
from jax import lax
from jax.experimental import pallas as pl
from jax.experimental.pallas import tpu as pltpu

# ----------------------------- config (synthetic) -----------------------------
PREFIX_SIZE = 64      # CLIP feature dim
N_EMBD      = 32      # GPT-2 hidden size
N_HEAD      = 4
HEAD_DIM    = N_EMBD // N_HEAD
N_LAYER     = 2
VOCAB       = 64
N_POS       = 32
LN_EPS      = 1e-5


# ------------------------------ in-kernel helpers ------------------------------
def _layernorm(x, g, b):
    mu = jnp.mean(x, axis=-1, keepdims=True)
    var = jnp.mean(jnp.square(x - mu), axis=-1, keepdims=True)
    return (x - mu) * lax.rsqrt(var + LN_EPS) * g + b


def _gelu_new(x):
    # GPT-2 "gelu_new"
    return 0.5 * x * (1.0 + jnp.tanh(
        jnp.sqrt(2.0 / jnp.pi) * (x + 0.044715 * x * x * x)))


def _bf16_dot(a, w):
    # bf16 MXU operands, f32 accumulation.
    return jnp.dot(a.astype(jnp.bfloat16), w.astype(jnp.bfloat16),
                   preferred_element_type=jnp.float32)


def _full_spec(arr):
    # whole-array block (satisfies tiling rule: block_shape == full dims)
    return pl.BlockSpec(arr.shape, lambda i: (0,) * arr.ndim)


# ------------------------------- Pallas kernels -------------------------------
def _clip_proj_kernel(x_ref, w_ref, b_ref, o_ref):
    y = _bf16_dot(x_ref[...], w_ref[...]) + b_ref[...]
    o_ref[...] = y.astype(o_ref.dtype)


def clip_project(x, w, b):
    """(B, prefix) @ (prefix, E) + b."""
    M = x.shape[0]
    N = w.shape[1]
    b2 = b.reshape(1, N)
    return pl.pallas_call(
        _clip_proj_kernel,
        out_shape=jax.ShapeDtypeStruct((M, N), jnp.float32),
        grid=(1,),
        in_specs=[_full_spec(x), _full_spec(w), _full_spec(b2)],
        out_specs=pl.BlockSpec((M, N), lambda i: (0, 0)),
        compiler_params=pltpu.CompilerParams(dimension_semantics=("arbitrary",)),
    )(x, w, b2)


def _block_kernel(h_ref, mask_ref,
                  ln1g_ref, ln1b_ref, attnw_ref, attnb_ref,
                  projw_ref, projb_ref,
                  ln2g_ref, ln2b_ref, fcw_ref, fcb_ref,
                  mpw_ref, mpb_ref,
                  o_ref, *, batch, seq, n_head, head_dim):
    """One full GPT-2 transformer block, activation resident in VMEM."""
    E = n_head * head_dim
    h = h_ref[...].astype(jnp.float32)                # (B*S, E)
    mask = mask_ref[...]                              # (S, S) additive causal bias

    # ---- LN1 + fused QKV projection ----
    ln1 = _layernorm(h, ln1g_ref[...], ln1b_ref[...])
    qkv = _bf16_dot(ln1, attnw_ref[...]) + attnb_ref[...]     # (B*S, 3E) f32

    projw = projw_ref[...]                             # (E, E)
    scale = 1.0 / math.sqrt(head_dim)

    # ---- causal multi-head attention (unrolled over batch x head) ----
    # Output projection is folded per head:
    #   attn @ proj_w == sum_h  out_h @ proj_w[h*Dh:(h+1)*Dh, :]
    attn_parts = []
    for b in range(batch):
        r0 = b * seq
        q_b = qkv[r0:r0 + seq, 0:E]
        k_b = qkv[r0:r0 + seq, E:2 * E]
        v_b = qkv[r0:r0 + seq, 2 * E:3 * E]
        acc = jnp.zeros((seq, E), jnp.float32)
        for hh in range(n_head):
            c0 = hh * head_dim
            qh = q_b[:, c0:c0 + head_dim] * scale      # scale folded into q
            kh = k_b[:, c0:c0 + head_dim]
            vh = v_b[:, c0:c0 + head_dim]
            s = lax.dot_general(qh, kh, (((1,), (1,)), ((), ())),
                                preferred_element_type=jnp.float32) + mask
            pr = jax.nn.softmax(s, axis=-1)
            oh = jnp.dot(pr, vh, preferred_element_type=jnp.float32)  # (S, Dh)
            acc = acc + _bf16_dot(oh, projw[c0:c0 + head_dim, :])
        attn_parts.append(acc)
    attn_proj = jnp.concatenate(attn_parts, axis=0) + projb_ref[...]  # (B*S, E)

    # ---- residual 1 ----
    h = h + attn_proj

    # ---- LN2 + MLP (fused gelu_new) + residual 2 ----
    ln2 = _layernorm(h, ln2g_ref[...], ln2b_ref[...])
    m = _gelu_new(_bf16_dot(ln2, fcw_ref[...]) + fcb_ref[...])        # (B*S, 4E)
    m = _bf16_dot(m, mpw_ref[...]) + mpb_ref[...]                     # (B*S, E)
    o_ref[...] = (h + m).astype(o_ref.dtype)


def gpt2_block(h2d, mask, p, *, batch, seq):
    M, E = h2d.shape
    kern = functools.partial(_block_kernel, batch=batch, seq=seq,
                             n_head=N_HEAD, head_dim=HEAD_DIM)
    args = [
        h2d, mask,
        p['ln1_g'].reshape(1, E), p['ln1_b'].reshape(1, E),
        p['attn_w'], p['attn_b'].reshape(1, 3 * E),
        p['proj_w'], p['proj_b'].reshape(1, E),
        p['ln2_g'].reshape(1, E), p['ln2_b'].reshape(1, E),
        p['fc_w'], p['fc_b'].reshape(1, 4 * E),
        p['mproj_w'], p['mproj_b'].reshape(1, E),
    ]
    return pl.pallas_call(
        kern,
        out_shape=jax.ShapeDtypeStruct((M, E), jnp.float32),
        grid=(1,),
        in_specs=[_full_spec(a) for a in args],
        out_specs=pl.BlockSpec((M, E), lambda i: (0, 0)),
        compiler_params=pltpu.CompilerParams(dimension_semantics=("arbitrary",)),
    )(*args)


def _head_kernel(h_ref, g_ref, b_ref, wte_ref, o_ref):
    """Fused final LayerNorm + tied lm_head (h @ wte^T via transposed dot)."""
    x = _layernorm(h_ref[...].astype(jnp.float32), g_ref[...], b_ref[...])
    logits = lax.dot_general(
        x.astype(jnp.bfloat16), wte_ref[...].astype(jnp.bfloat16),
        (((1,), (1,)), ((), ())),                      # contract x's E with wte's E
        preferred_element_type=jnp.float32)
    o_ref[...] = logits.astype(o_ref.dtype)


def lm_head(h2d, lnf_g, lnf_b, wte):
    M, E = h2d.shape
    V = wte.shape[0]
    args = [h2d, lnf_g.reshape(1, E), lnf_b.reshape(1, E), wte]
    return pl.pallas_call(
        _head_kernel,
        out_shape=jax.ShapeDtypeStruct((M, V), jnp.float32),
        grid=(1,),
        in_specs=[_full_spec(a) for a in args],
        out_specs=pl.BlockSpec((M, V), lambda i: (0, 0)),
        compiler_params=pltpu.CompilerParams(dimension_semantics=("arbitrary",)),
    )(*args)


# ------------------------------ parameter setup ------------------------------
def init_params(key):
    ks = jax.random.split(key, 3 + 4 * N_LAYER)
    it = iter(ks)

    def n01(shape, dtype=jnp.bfloat16):
        # matmul weights stored bf16 (MXU operand dtype); everything else f32
        return (0.02 * jax.random.normal(next(it), shape, jnp.float32)).astype(dtype)

    params = {
        'wte': n01((VOCAB, N_EMBD)),                       # tied embedding / lm_head
        'wpe': n01((N_POS, N_EMBD), jnp.float32),
        'clip_w': n01((PREFIX_SIZE, N_EMBD)),
        'clip_b': jnp.zeros((N_EMBD,), jnp.float32),
        'lnf_g': jnp.ones((N_EMBD,), jnp.float32),
        'lnf_b': jnp.zeros((N_EMBD,), jnp.float32),
        'blocks': [],
    }
    for _ in range(N_LAYER):
        blk = {
            'ln1_g': jnp.ones((N_EMBD,), jnp.float32),
            'ln1_b': jnp.zeros((N_EMBD,), jnp.float32),
            'attn_w': n01((N_EMBD, 3 * N_EMBD)),           # HF Conv1D layout (in, out)
            'attn_b': jnp.zeros((3 * N_EMBD,), jnp.float32),
            'proj_w': n01((N_EMBD, N_EMBD)),
            'proj_b': jnp.zeros((N_EMBD,), jnp.float32),
            'ln2_g': jnp.ones((N_EMBD,), jnp.float32),
            'ln2_b': jnp.zeros((N_EMBD,), jnp.float32),
            'fc_w': n01((N_EMBD, 4 * N_EMBD)),
            'fc_b': jnp.zeros((4 * N_EMBD,), jnp.float32),
            'mproj_w': n01((4 * N_EMBD, N_EMBD)),
            'mproj_b': jnp.zeros((N_EMBD,), jnp.float32),
        }
        params['blocks'].append(blk)
    return params


# ------------------------------- model forward --------------------------------
def decap_forward(params, clip_features, gpt_tokens):
    B, T = gpt_tokens.shape
    E = N_EMBD
    S = T + 1

    # embedding_text = decoder.transformer.wte(gpt_tokens)  (gather: plain-JAX glue)
    emb_text = params['wte'][gpt_tokens].astype(jnp.float32)        # (B, T, E)

    # embedding_clip = clip_project(clip_features)  (single Linear, no act)
    emb_clip = clip_project(clip_features, params['clip_w'], params['clip_b'])  # (B, E)

    # embedding_cat = cat([clip, text], dim=1)  + position embeddings
    emb = jnp.concatenate([emb_clip[:, None, :], emb_text], axis=1)  # (B, S, E)
    h2d = (emb + params['wpe'][:S][None, :, :]).reshape(B * S, E)

    # causal additive bias, computed once and shared by every block kernel
    qi = lax.broadcasted_iota(jnp.int32, (S, S), 0)
    ki = lax.broadcasted_iota(jnp.int32, (S, S), 1)
    mask = jnp.where(ki <= qi, 0.0, -1e30).astype(jnp.float32)

    # GPT-2 transformer: one fused Pallas kernel per block
    for blk in params['blocks']:
        h2d = gpt2_block(h2d, mask, blk, batch=B, seq=S)

    # fused ln_f + lm_head (tied to wte, consumed transposed in-kernel)
    logits = lm_head(h2d, params['lnf_g'], params['lnf_b'], params['wte'])
    return logits.reshape(B, S, VOCAB)


# ------------------------------------ main ------------------------------------
if __name__ == "__main__":
    key = jax.random.PRNGKey(0)
    k_param, k_feat, k_tok = jax.random.split(key, 3)

    params = init_params(k_param)

    B, T = 2, 7
    clip_features = jax.random.normal(k_feat, (B, PREFIX_SIZE), jnp.float32)
    gpt_tokens = jax.random.randint(k_tok, (B, T), 0, VOCAB, jnp.int32)

    logits = decap_forward(params, clip_features, gpt_tokens)
    logits = jax.block_until_ready(logits)

    assert logits.shape == (B, T + 1, VOCAB), logits.shape
    assert bool(jnp.all(jnp.isfinite(logits)))
    print("KERNEL_OK")
</pallas_src>

<mosaic_0001>
module attributes {stable_mosaic.version = 11 : i64} {
  func.func @_clip_proj_kernel(%arg0: i32, %arg1: memref<2x64xf32, #tpu.memory_space<vmem>>, %arg2: memref<64x32xbf16, #tpu.memory_space<vmem>>, %arg3: memref<1x32xf32, #tpu.memory_space<vmem>>, %arg4: memref<2x32xf32, #tpu.memory_space<vmem>>) attributes {dimension_semantics = [#tpu.dimension_semantics<arbitrary>], iteration_bounds = array<i64: 1>, scalar_prefetch = 0 : i64, scratch_operands = 0 : i64, tpu.core_type = #tpu.core_type<tc>, window_params = [{pipeline_mode = #tpu.pipeline_mode<synchronous>, transform_indices = @transform_0, window_bounds = array<i64: 2, 64>}, {pipeline_mode = #tpu.pipeline_mode<synchronous>, transform_indices = @transform_1, window_bounds = array<i64: 64, 32>}, {pipeline_mode = #tpu.pipeline_mode<synchronous>, transform_indices = @transform_2, window_bounds = array<i64: 1, 32>}, {pipeline_mode = #tpu.pipeline_mode<synchronous>, transform_indices = @transform_3, window_bounds = array<i64: 2, 32>}]} {
    %c0 = arith.constant 0 : index
    %c0_0 = arith.constant 0 : index
    %0 = vector.load %arg1[%c0, %c0_0] : memref<2x64xf32, #tpu.memory_space<vmem>>, vector<2x64xf32>
    %c0_1 = arith.constant 0 : index
    %c0_2 = arith.constant 0 : index
    %1 = vector.load %arg2[%c0_1, %c0_2] : memref<64x32xbf16, #tpu.memory_space<vmem>>, vector<64x32xbf16>
    %2 = arith.truncf %0 : vector<2x64xf32> to vector<2x64xbf16>
    %cst = arith.constant dense<0.000000e+00> : vector<2x32xf32>
    %3 = tpu.matmul %2, %1, %cst {dimension_numbers = #tpu.dot_dimension_numbers<[1], [0], [0], [1], [0, 0, 1, 1], [], []>} : vector<2x64xbf16>, vector<64x32xbf16>, vector<2x32xf32> -> vector<2x32xf32>
    %c0_3 = arith.constant 0 : index
    %c0_4 = arith.constant 0 : index
    %4 = vector.load %arg3[%c0_3, %c0_4] : memref<1x32xf32, #tpu.memory_space<vmem>>, vector<1x32xf32>
    %5 = vector.broadcast %4 : vector<1x32xf32> to vector<2x32xf32>
    %6 = arith.addf %3, %5 : vector<2x32xf32>
    %c0_5 = arith.constant 0 : index
    %c0_6 = arith.constant 0 : index
    %7 = vector.load %arg4[%c0_5, %c0_6] : memref<2x32xf32, #tpu.memory_space<vmem>>, vector<2x32xf32>
    tpu.vector_store %arg4[%c0_5, %c0_6], %6 {strides = array<i32>} : memref<2x32xf32, #tpu.memory_space<vmem>>, vector<2x32xf32>,
    return
  }
  func.func @transform_0(%arg0: i32) -> (i32, i32) {
    %c0_i32 = arith.constant 0 : i32
    %c0_i32_0 = arith.constant 0 : i32
    %c0_i32_1 = arith.constant 0 : i32
    return %c0_i32, %c0_i32_0 : i32, i32
  }
  func.func @transform_1(%arg0: i32) -> (i32, i32) {
    %c0_i32 = arith.constant 0 : i32
    %c0_i32_0 = arith.constant 0 : i32
    %c0_i32_1 = arith.constant 0 : i32
    return %c0_i32, %c0_i32_0 : i32, i32
  }
  func.func @transform_2(%arg0: i32) -> (i32, i32) {
    %c0_i32 = arith.constant 0 : i32
    %c0_i32_0 = arith.constant 0 : i32
    %c0_i32_1 = arith.constant 0 : i32
    return %c0_i32, %c0_i32_0 : i32, i32
  }
  func.func @transform_3(%arg0: i32) -> (i32, i32) {
    %c0_i32 = arith.constant 0 : i32
    %c0_i32_0 = arith.constant 0 : i32
    %c0_i32_1 = arith.constant 0 : i32
    return %c0_i32, %c0_i32_0 : i32, i32
  }
}

</mosaic_0001>

<llo_original>
// kernel: tpu_custom_call.1
$region0: #{tpu_custom_call.1}
  #allocation0 [shape = 'u32[]', space=smem, size = 0x4, offset = 0x4, fixed_abs, tag = 'smem constant byte address 0x4 - core index']
  #allocation1 [shape = 'u32[144,128]{1,0:T(1,128)}', space=vmem, size = 0x12000, scoped, tag = 'internal scratch']
  %s0 = inlined_call_operand.vmem [shape: f32[2,64], index: 0, kind: input, shape index: {}]
  %s1 = inlined_call_operand.vmem [shape: bf16[64,32], index: 1, kind: input, shape index: {}]
  %s2 = inlined_call_operand.vmem [shape: f32[1,32], index: 2, kind: input, shape index: {}]
  %s3 = inlined_call_operand.hbm [shape: f32[2,32], index: 3, kind: output, shape index: {}]
  %s4 = sld [smem:[#allocation0]]
  $region22: #{tpu_custom_call.1} parent=0
    _
  %s6 = ssub.s32 1, %s4
  %s7 = scalar_select 0, %s6, %s4
  $region1: #{tpu_custom_call.1} parent=0
    #allocation2 [shape = 'u8[1024]{0}', space=vmem, size = 0x400, scoped, tag = 'output window, operand 0, single buffered']
    #allocation3 [shape = 's32[1]{0}', space=sflag, size = 0x4, scoped, tag = 'scoped memory for tpu_custom_call.1']
    %8 = vsyncpa [#allocation3], 0
    // Predicated region
    $region2: #{tpu_custom_call.1} parent=1 // pred_check
      _
    $region3: #{tpu_custom_call.1} parent=1 // pred_check_branch
      %10 = sbr.rel (0) target = $region5
    $region4: #{tpu_custom_call.1} parent=1 // pred_region
      _
    $region5: #{tpu_custom_call.1} parent=1 // pred_fallthru
      _
    // Predicated region
    $region6: #{tpu_custom_call.1} parent=1 // pred_check
      _
    $region7: #{tpu_custom_call.1} parent=1 // pred_check_branch
      %12 = sbr.rel (0) target = $region9
    $region8: #{tpu_custom_call.1} parent=1 // pred_region
      _
    $region9: #{tpu_custom_call.1} parent=1 // pred_fallthru
      _
    // Predicated region
    $region10: #{tpu_custom_call.1} parent=1 // pred_check
      _
    $region11: #{tpu_custom_call.1} parent=1 // pred_check_branch
      %14 = sbr.rel (0) target = $region13
    $region12: #{tpu_custom_call.1} parent=1 // pred_region
      _
    $region13: #{tpu_custom_call.1} parent=1 // pred_fallthru
      _
    %v16 = vld [vmem:[%s0] sm:$0x3]
    %v17 = vld [vmem:[%s1] sm:$0xf]
    %v18 = vld [vmem:[%s1 + $0x4] sm:$0xf]
    %v19 = vld [vmem:[%s1 + $0x8] sm:$0xf]
    %v20 = vld [vmem:[%s1 + $0xc] sm:$0xf]
    %v21 = vld [vmem:[%s1 + $0x10] sm:$0xf]
    %v22 = vld [vmem:[%s1 + $0x14] sm:$0xf]
    %v23 = vld [vmem:[%s1 + $0x18] sm:$0xf]
    %v24 = vld [vmem:[%s1 + $0x1c] sm:$0xf]
    %v25 = vpack.c.bf16 %v16, %v16
    %v26 = vld [vmem:[%s2] sm:$0x1]
    %v28 = vlaneseq
    %v29 = vshrl.u32 %v28, 7
    %v30 = vsub.s32 0, %v29
    %v31 = vrot.slane %v26, %v30
    %v41 = vunpack.c.l.b16 %v17
    %v42 = vunpack.c.l.b16 %v18
    %v43 = vunpack.c.l.b16 %v19
    %v44 = vunpack.c.l.b16 %v20
    %v45 = vunpack.c.l.b16 %v21
    %v46 = vunpack.c.l.b16 %v22
    %v47 = vunpack.c.l.b16 %v23
    %v48 = vunpack.c.l.b16 %v24
    %v49 = vpack.c.b16 %v42, %v41
    %v50 = vpack.c.b16 %v44, %v43
    %v51 = vpack.c.b16 %v46, %v45
    %v52 = vpack.c.b16 %v48, %v47
    %vm57 = vcmask 523264
    %v59 = vsel %vm57, %v25, 0
    %61 = vmatprep.subr.bf16.mxu0 0
    %62 = vmatpush1.bf16.msra.mxu0 0
    %63 = vmatprep.subr.bf16.mxu0 0
    %64 = vmatpush1.bf16.msra.mxu0 0
    %65 = vmatprep.subr.bf16.mxu0 0
    %66 = vmatpush1.bf16.msra.mxu0 0
    %67 = vmatprep.subr.bf16.mxu0 0
    %68 = vmatpush1.bf16.msra.mxu0 0
    %69 = vmatprep.subr.bf16.mxu0 0
    %70 = vmatpush1.bf16.msra.mxu0 %v52
    %71 = vmatprep.subr.bf16.mxu0 0
    %72 = vmatpush1.bf16.msra.mxu0 %v51
    %73 = vmatprep.subr.bf16.mxu0 0
    %74 = vmatpush1.bf16.msra.mxu0 %v50
    %75 = vmatprep.subr.bf16.mxu0 0
    %76 = vmatpush1.bf16.msra.mxu0 %v49
    %77 = vmatprep.subr.bf16.mxu0 0
    %78 = vmatpush2.bf16.msra.mxu0 0
    %79 = vmatprep.subr.bf16.mxu0 0
    %80 = vmatpush2.bf16.msra.mxu0 0
    %81 = vmatprep.subr.bf16.mxu0 0
    %82 = vmatpush2.bf16.msra.mxu0 0
    %83 = vmatprep.subr.bf16.mxu0 0
    %84 = vmatpush2.bf16.msra.mxu0 0
    %85 = vmatprep.subr.bf16.mxu0 0
    %86 = vmatpush2.bf16.msra.mxu0 0
    %87 = vmatprep.subr.bf16.mxu0 0
    %88 = vmatpush2.bf16.msra.mxu0 0
    %89 = vmatprep.subr.bf16.mxu0 0
    %90 = vmatpush2.bf16.msra.mxu0 0
    %91 = vmatprep.subr.bf16.mxu0 0
    %92 = vmatpush2.bf16.msra.mxu0 0
    %93 = vmatprep.mubr.bf16.mxu0 0
    %94 = vmatmul.mubr.bf16.gmra.mxu0 %v59
    %v95 = vpop.f32.mrf.mxu0
    %v96 = vadd.f32 %v31, %v95
    %v97 = vpop.f32.mrf.mxu0
    %v98 = vpop.f32.mrf.mxu0
    %v99 = vpop.f32.mrf.mxu0
    %100 = vdwg.mxu0
    %vm101 = vcmask 254976
    %102 = vst.msk [vmem:[#allocation2] sm:$0x3] %vm101, %v96
    // Predicated region
    $region14: #{tpu_custom_call.1} parent=1 // pred_check
      _
    $region15: #{tpu_custom_call.1} parent=1 // pred_check_branch
      %104 = sbr.rel (0) target = $region17
    $region16: #{tpu_custom_call.1} parent=1 // pred_region
      %s106 = ssub.s32 32, 32
      %107 = vsyncadd [#allocation3], %s106
      %s109 = sshll.u32 [#allocation2], 4
      %s110 = int_to_ptr.vmem [resolvable:$true] %s109
      %112 = dma.vmem_to_hbm [thread:$0]  %s110, 32, %s3, [#allocation3]
    $region17: #{tpu_custom_call.1} parent=1 // pred_fallthru
      _
    // Predicated region
    $region18: #{tpu_custom_call.1} parent=1 // pred_check
      _
    $region19: #{tpu_custom_call.1} parent=1 // pred_check_branch
      %114 = sbr.rel (0) target = $region21
    $region20: #{tpu_custom_call.1} parent=1 // pred_region
      %115 = dma.done [#allocation3], 32
    $region21: #{tpu_custom_call.1} parent=1 // pred_fallthru
      _
    %116 = vsyncpa [#allocation3], 1

</llo_original>
